<compile_context>
chip_gen: v5e
topology: v5e:2x2
jax: 0.10.0
libtpu: 0.0.40
codegen_flags: <defaults>
</compile_context>

<pallas_src>
import jax
import jax.numpy as jnp
from jax.experimental import pallas as pl
from jax.experimental.pallas import tpu as pltpu

LN_EPS = 1e-5
LANE = 128


def _round_up(n, m):
    return ((n + m - 1) // m) * m


def _silu(x):
    return x * jax.nn.sigmoid(x)


# ----------------------------------------------------------------------------- kernel
def _make_kernel(in_pad, in_dim, out_dim):
    """Kernel over one batch tile. Feature dims are padded; LN uses the true dims."""
    inv_in = 1.0 / float(in_dim)
    inv_out = 1.0 / float(out_dim)

    def kernel(xe_ref, wf1_ref, wf2_ref, ln1_ref, p2_ref, out_ref):
        xe = xe_ref[...].astype(jnp.float32)          # (TB, in_pad + emb_pad)
        x = xe[:, :in_pad]                            # (TB, in_pad)   padded lanes are 0
        e = xe[:, in_pad:]                            # (TB, emb_pad)  padded lanes are 0

        ln1 = ln1_ref[...]                            # (2, in_pad)  [gamma1; beta1]
        g1, b1 = ln1[0:1, :], ln1[1:2, :]
        p2 = p2_ref[...]                              # (4, out_pad) [gamma2; beta2; b1+bc; b2+bskip]
        g2, b2 = p2[0:1, :], p2[1:2, :]
        bias1, bias2 = p2[2:3, :], p2[3:4, :]

        # ---- LayerNorm1 + SiLU (f32, one-pass variance over the true in_dim) ----
        mu = jnp.sum(x, axis=-1, keepdims=True) * inv_in
        var = jnp.maximum(jnp.sum(x * x, axis=-1, keepdims=True) * inv_in - mu * mu, 0.0)
        xn = (x - mu) * jax.lax.rsqrt(var + LN_EPS) * g1 + b1
        a1 = jnp.concatenate([_silu(xn), _silu(e)], axis=-1).astype(jnp.bfloat16)

        # ---- fused MXU matmul #1: [w1 ; wc], bias = b1 + bc -> h = net1(x) + cond_proj(emb)
        h = jnp.dot(a1, wf1_ref[...], preferred_element_type=jnp.float32) + bias1

        # ---- LayerNorm2 + SiLU (f32, over the true out_dim) ----
        mu2 = jnp.sum(h, axis=-1, keepdims=True) * inv_out
        var2 = jnp.maximum(jnp.sum(h * h, axis=-1, keepdims=True) * inv_out - mu2 * mu2, 0.0)
        hn = (h - mu2) * jax.lax.rsqrt(var2 + LN_EPS) * g2 + b2
        a2 = jnp.concatenate([_silu(hn), x], axis=-1).astype(jnp.bfloat16)

        # ---- fused MXU matmul #2: [w2 ; wskip], bias = b2 + bskip -> net2(h) + skip_proj(x)
        out = jnp.dot(a2, wf2_ref[...], preferred_element_type=jnp.float32) + bias2
        out_ref[...] = out.astype(out_ref.dtype)

    return kernel


# ----------------------------------------------------------------------------- wrapper
def resnet_block(x, emb, params, *, tb=256):
    """x: (B, in_dim), emb: (B, emb_dim). Returns (B, out_dim)."""
    B, in_dim = x.shape
    emb_dim = emb.shape[1]
    out_dim = params["w1"].shape[1]

    in_pad = _round_up(in_dim, LANE)
    emb_pad = _round_up(emb_dim, LANE)
    out_pad = _round_up(out_dim, LANE)

    tb_eff = min(tb, _round_up(B, 8))
    tb_eff = _round_up(tb_eff, 8)
    b_pad = _round_up(B, tb_eff)
    grid = (b_pad // tb_eff,)

    f32 = jnp.float32

    def pad_mat(w, r, c):
        w = w.astype(f32)
        return jnp.pad(w, ((0, r - w.shape[0]), (0, c - w.shape[1])))

    def pad_vec(v, n):
        v = v.astype(f32).reshape(-1)
        return jnp.pad(v, (0, n - v.shape[0]))

    # Activations: concat padded x and padded emb -> one lane-dense input operand.
    x_p = jnp.pad(x.astype(f32), ((0, b_pad - B), (0, in_pad - in_dim)))
    e_p = jnp.pad(emb.astype(f32), ((0, b_pad - B), (0, emb_pad - emb_dim)))
    xe = jnp.concatenate([x_p, e_p], axis=1)                     # (b_pad, in_pad+emb_pad)

    # Fused, zero-padded, bf16 weights (resident in VMEM across all batch tiles).
    wf1 = jnp.concatenate(
        [pad_mat(params["w1"], in_pad, out_pad), pad_mat(params["wc"], emb_pad, out_pad)],
        axis=0).astype(jnp.bfloat16)                             # (in_pad+emb_pad, out_pad)
    wf2 = jnp.concatenate(
        [pad_mat(params["w2"], out_pad, out_pad), pad_mat(params["wskip"], in_pad, out_pad)],
        axis=0).astype(jnp.bfloat16)                             # (out_pad+in_pad, out_pad)

    # Packed small parameters (2 operands instead of 8).
    ln1_pack = jnp.stack(
        [pad_vec(params["ln1_g"], in_pad), pad_vec(params["ln1_b"], in_pad)])      # (2, in_pad)
    p2_pack = jnp.stack(
        [pad_vec(params["ln2_g"], out_pad),
         pad_vec(params["ln2_b"], out_pad),
         pad_vec(params["b1"] + params["bc"], out_pad),
         pad_vec(params["b2"] + params["bskip"], out_pad)])                        # (4, out_pad)

    kernel = _make_kernel(in_pad, in_dim, out_dim)

    # Rough VMEM need (double-buffered activations + resident weights) with headroom.
    vmem_bytes = (2 * tb_eff * (in_pad + emb_pad) * 4
                  + 2 * tb_eff * out_pad * 4
                  + wf1.size * 2 + wf2.size * 2
                  + ln1_pack.size * 4 + p2_pack.size * 4)
    vmem_limit = min(max(4 * vmem_bytes, 4 * 1024 * 1024), 48 * 1024 * 1024)

    out_full = pl.pallas_call(
        kernel,
        out_shape=jax.ShapeDtypeStruct((b_pad, out_pad), x.dtype),
        grid=grid,
        in_specs=[
            pl.BlockSpec((tb_eff, in_pad + emb_pad), lambda i: (i, 0)),   # batch-tiled
            pl.BlockSpec((in_pad + emb_pad, out_pad), lambda i: (0, 0)),  # resident weights
            pl.BlockSpec((out_pad + in_pad, out_pad), lambda i: (0, 0)),  # resident weights
            pl.BlockSpec((2, in_pad), lambda i: (0, 0)),                  # resident params
            pl.BlockSpec((4, out_pad), lambda i: (0, 0)),                 # resident params
        ],
        out_specs=pl.BlockSpec((tb_eff, out_pad), lambda i: (i, 0)),
        compiler_params=pltpu.CompilerParams(
            dimension_semantics=("parallel",),
            vmem_limit_bytes=int(vmem_limit)),
    )(xe, wf1, wf2, ln1_pack, p2_pack)

    return out_full[:B, :out_dim]


# ----------------------------------------------------------------------------- reference
def resnet_block_ref(x, emb, p):
    """Pure-JAX f32 reference with the module's exact semantics."""
    def ln(v, g, b):
        mu = jnp.mean(v, axis=-1, keepdims=True)
        var = jnp.mean((v - mu) * (v - mu), axis=-1, keepdims=True)
        return (v - mu) * jax.lax.rsqrt(var + LN_EPS) * g + b

    h = _silu(ln(x, p["ln1_g"], p["ln1_b"])) @ p["w1"] + p["b1"]
    e = _silu(emb) @ p["wc"] + p["bc"]
    h = h + e
    h2 = _silu(ln(h, p["ln2_g"], p["ln2_b"])) @ p["w2"] + p["b2"]
    xs = x @ p["wskip"] + p["bskip"]
    return xs + h2


def make_params(key, in_dim, out_dim, emb_dim):
    ks = jax.random.split(key, 8)
    f32 = jnp.float32
    return {
        # LayerNorm(in_dim)
        "ln1_g": jax.random.normal(ks[0], (1, in_dim), f32) * 0.1 + 1.0,
        "ln1_b": jax.random.normal(ks[1], (1, in_dim), f32) * 0.1,
        # Linear(in_dim, out_dim), stored transposed (in, out)
        "w1": jax.random.normal(ks[2], (in_dim, out_dim), f32) * 0.05,
        "b1": jax.random.normal(ks[3], (1, out_dim), f32) * 0.05,
        # cond_proj Linear(emb_dim, out_dim)
        "wc": jax.random.normal(ks[4], (emb_dim, out_dim), f32) * 0.05,
        "bc": jax.random.normal(ks[5], (1, out_dim), f32) * 0.05,
        # LayerNorm(out_dim)
        "ln2_g": jax.random.normal(ks[6], (1, out_dim), f32) * 0.1 + 1.0,
        "ln2_b": jax.random.normal(ks[7], (1, out_dim), f32) * 0.1,
        # zero_init(Linear(out_dim, out_dim)) — faithful to the module's __init__
        "w2": jnp.zeros((out_dim, out_dim), f32),
        "b2": jnp.zeros((1, out_dim), f32),
        # skip_proj Linear(in_dim, out_dim)
        "wskip": jax.random.normal(jax.random.fold_in(key, 99), (in_dim, out_dim), f32) * 0.05,
        "bskip": jax.random.normal(jax.random.fold_in(key, 100), (1, out_dim), f32) * 0.05,
    }


if __name__ == "__main__":
    # small shapes: batch=40 (tiled by 16 -> 3 grid steps), in_dim=32, out_dim=64, emb_dim=16
    B, IN_DIM, OUT_DIM, EMB_DIM = 40, 32, 64, 16

    key = jax.random.PRNGKey(0)
    kx, ke, kp = jax.random.split(key, 3)
    x = jax.random.normal(kx, (B, IN_DIM), jnp.float32)
    emb = jax.random.normal(ke, (B, EMB_DIM), jnp.float32)
    params = make_params(kp, IN_DIM, OUT_DIM, EMB_DIM)

    # Faithful (zero-init net2) parameters.
    out = jax.block_until_ready(resnet_block(x, emb, params, tb=16))
    ref = resnet_block_ref(x, emb, params)
    assert out.shape == (B, OUT_DIM)
    # bf16 MXU operands with f32 accumulation -> small numeric difference vs pure-f32 ref.
    assert jnp.allclose(out, ref, atol=3e-2, rtol=3e-2), "mismatch vs. pure-JAX reference"

    # Exercise the full datapath with nonzero ("trained") net2 weights as well.
    p2 = dict(params)
    p2["w2"] = jax.random.normal(jax.random.fold_in(kp, 7), (OUT_DIM, OUT_DIM), jnp.float32) * 0.05
    p2["b2"] = jax.random.normal(jax.random.fold_in(kp, 8), (1, OUT_DIM), jnp.float32) * 0.05
    out2 = jax.block_until_ready(resnet_block(x, emb, p2, tb=16))
    ref2 = resnet_block_ref(x, emb, p2)
    assert jnp.allclose(out2, ref2, atol=3e-2, rtol=3e-2), "mismatch vs. pure-JAX reference (nonzero net2)"

    print("KERNEL_OK")
</pallas_src>

<mosaic_0001>
module attributes {stable_mosaic.version = 11 : i64} {
  func.func @kernel(%arg0: i32, %arg1: memref<16x256xf32, #tpu.memory_space<vmem>>, %arg2: memref<256x128xbf16, #tpu.memory_space<vmem>>, %arg3: memref<256x128xbf16, #tpu.memory_space<vmem>>, %arg4: memref<2x128xf32, #tpu.memory_space<vmem>>, %arg5: memref<4x128xf32, #tpu.memory_space<vmem>>, %arg6: memref<16x128xf32, #tpu.memory_space<vmem>>) attributes {dimension_semantics = [#tpu.dimension_semantics<parallel>], iteration_bounds = array<i64: 3>, scalar_prefetch = 0 : i64, scratch_operands = 0 : i64, tpu.core_type = #tpu.core_type<tc>, window_params = [{transform_indices = @transform_0, window_bounds = array<i64: 16, 256>}, {pipeline_mode = #tpu.pipeline_mode<synchronous>, transform_indices = @transform_1, window_bounds = array<i64: 256, 128>}, {pipeline_mode = #tpu.pipeline_mode<synchronous>, transform_indices = @transform_2, window_bounds = array<i64: 256, 128>}, {pipeline_mode = #tpu.pipeline_mode<synchronous>, transform_indices = @transform_3, window_bounds = array<i64: 2, 128>}, {pipeline_mode = #tpu.pipeline_mode<synchronous>, transform_indices = @transform_4, window_bounds = array<i64: 4, 128>}, {transform_indices = @transform_5, window_bounds = array<i64: 16, 128>}]} {
    %c0 = arith.constant 0 : index
    %c0_0 = arith.constant 0 : index
    %0 = vector.load %arg1[%c0, %c0_0] : memref<16x256xf32, #tpu.memory_space<vmem>>, vector<16x256xf32>
    %1 = vector.extract_strided_slice %0 {offsets = [0, 0], sizes = [16, 128], strides = [1, 1]} : vector<16x256xf32> to vector<16x128xf32>
    %2 = vector.extract_strided_slice %0 {offsets = [0, 128], sizes = [16, 128], strides = [1, 1]} : vector<16x256xf32> to vector<16x128xf32>
    %c0_1 = arith.constant 0 : index
    %c0_2 = arith.constant 0 : index
    %3 = vector.load %arg4[%c0_1, %c0_2] : memref<2x128xf32, #tpu.memory_space<vmem>>, vector<2x128xf32>
    %4 = vector.extract_strided_slice %3 {offsets = [0, 0], sizes = [1, 128], strides = [1, 1]} : vector<2x128xf32> to vector<1x128xf32>
    %5 = vector.extract_strided_slice %3 {offsets = [1, 0], sizes = [1, 128], strides = [1, 1]} : vector<2x128xf32> to vector<1x128xf32>
    %c0_3 = arith.constant 0 : index
    %c0_4 = arith.constant 0 : index
    %6 = vector.load %arg5[%c0_3, %c0_4] : memref<4x128xf32, #tpu.memory_space<vmem>>, vector<4x128xf32>
    %7 = vector.extract_strided_slice %6 {offsets = [0, 0], sizes = [1, 128], strides = [1, 1]} : vector<4x128xf32> to vector<1x128xf32>
    %8 = vector.extract_strided_slice %6 {offsets = [1, 0], sizes = [1, 128], strides = [1, 1]} : vector<4x128xf32> to vector<1x128xf32>
    %9 = vector.extract_strided_slice %6 {offsets = [2, 0], sizes = [1, 128], strides = [1, 1]} : vector<4x128xf32> to vector<1x128xf32>
    %10 = vector.extract_strided_slice %6 {offsets = [3, 0], sizes = [1, 128], strides = [1, 1]} : vector<4x128xf32> to vector<1x128xf32>
    %cst = arith.constant dense<0.000000e+00> : vector<16xf32>
    %11 = vector.multi_reduction <add>, %1, %cst [1] : vector<16x128xf32> to vector<16xf32>
    %12 = vector.shape_cast %11 : vector<16xf32> to vector<16x1xf32>
    %cst_5 = arith.constant 3.125000e-02 : f32
    %13 = vector.broadcast %cst_5 : f32 to vector<16x1xf32>
    %14 = arith.mulf %12, %13 : vector<16x1xf32>
    %15 = arith.mulf %1, %1 : vector<16x128xf32>
    %cst_6 = arith.constant dense<0.000000e+00> : vector<16xf32>
    %16 = vector.multi_reduction <add>, %15, %cst_6 [1] : vector<16x128xf32> to vector<16xf32>
    %17 = vector.shape_cast %16 : vector<16xf32> to vector<16x1xf32>
    %cst_7 = arith.constant 3.125000e-02 : f32
    %18 = vector.broadcast %cst_7 : f32 to vector<16x1xf32>
    %19 = arith.mulf %17, %18 : vector<16x1xf32>
    %20 = arith.mulf %14, %14 : vector<16x1xf32>
    %21 = arith.subf %19, %20 : vector<16x1xf32>
    %cst_8 = arith.constant 0.000000e+00 : f32
    %22 = vector.broadcast %cst_8 : f32 to vector<16x1xf32>
    %23 = arith.maximumf %21, %22 : vector<16x1xf32>
    %24 = vector.broadcast %14 : vector<16x1xf32> to vector<16x128xf32>
    %25 = arith.subf %1, %24 : vector<16x128xf32>
    %cst_9 = arith.constant 9.99999974E-6 : f32
    %26 = vector.broadcast %cst_9 : f32 to vector<16x1xf32>
    %27 = arith.addf %23, %26 : vector<16x1xf32>
    %28 = math.rsqrt %27 : vector<16x1xf32>
    %29 = vector.broadcast %28 : vector<16x1xf32> to vector<16x128xf32>
    %30 = arith.mulf %25, %29 : vector<16x128xf32>
    %31 = vector.broadcast %4 : vector<1x128xf32> to vector<16x128xf32>
    %32 = arith.mulf %30, %31 : vector<16x128xf32>
    %33 = vector.broadcast %5 : vector<1x128xf32> to vector<16x128xf32>
    %34 = arith.addf %32, %33 : vector<16x128xf32>
    %35 = arith.negf %34 : vector<16x128xf32>
    %36 = math.exp %35 : vector<16x128xf32>
    %cst_10 = arith.constant 1.000000e+00 : f32
    %37 = vector.broadcast %cst_10 : f32 to vector<16x128xf32>
    %38 = arith.addf %37, %36 : vector<16x128xf32>
    %39 = arith.divf %37, %38 : vector<16x128xf32>
    %40 = arith.mulf %34, %39 : vector<16x128xf32>
    %41 = arith.negf %2 : vector<16x128xf32>
    %42 = math.exp %41 : vector<16x128xf32>
    %cst_11 = arith.constant 1.000000e+00 : f32
    %43 = vector.broadcast %cst_11 : f32 to vector<16x128xf32>
    %44 = arith.addf %43, %42 : vector<16x128xf32>
    %45 = arith.divf %43, %44 : vector<16x128xf32>
    %46 = arith.mulf %2, %45 : vector<16x128xf32>
    %47 = tpu.concatenate %40, %46 in 1 : vector<16x128xf32>, vector<16x128xf32> -> vector<16x256xf32>
    %48 = arith.truncf %47 : vector<16x256xf32> to vector<16x256xbf16>
    %c0_12 = arith.constant 0 : index
    %c0_13 = arith.constant 0 : index
    %49 = vector.load %arg2[%c0_12, %c0_13] : memref<256x128xbf16, #tpu.memory_space<vmem>>, vector<256x128xbf16>
    %cst_14 = arith.constant dense<0.000000e+00> : vector<16x128xf32>
    %50 = tpu.matmul %48, %49, %cst_14 {dimension_numbers = #tpu.dot_dimension_numbers<[1], [0], [0], [1], [0, 0, 1, 1], [], []>} : vector<16x256xbf16>, vector<256x128xbf16>, vector<16x128xf32> -> vector<16x128xf32>
    %51 = vector.broadcast %9 : vector<1x128xf32> to vector<16x128xf32>
    %52 = arith.addf %50, %51 : vector<16x128xf32>
    %cst_15 = arith.constant dense<0.000000e+00> : vector<16xf32>
    %53 = vector.multi_reduction <add>, %52, %cst_15 [1] : vector<16x128xf32> to vector<16xf32>
    %54 = vector.shape_cast %53 : vector<16xf32> to vector<16x1xf32>
    %cst_16 = arith.constant 1.562500e-02 : f32
    %55 = vector.broadcast %cst_16 : f32 to vector<16x1xf32>
    %56 = arith.mulf %54, %55 : vector<16x1xf32>
    %57 = arith.mulf %52, %52 : vector<16x128xf32>
    %cst_17 = arith.constant dense<0.000000e+00> : vector<16xf32>
    %58 = vector.multi_reduction <add>, %57, %cst_17 [1] : vector<16x128xf32> to vector<16xf32>
    %59 = vector.shape_cast %58 : vector<16xf32> to vector<16x1xf32>
    %cst_18 = arith.constant 1.562500e-02 : f32
    %60 = vector.broadcast %cst_18 : f32 to vector<16x1xf32>
    %61 = arith.mulf %59, %60 : vector<16x1xf32>
    %62 = arith.mulf %56, %56 : vector<16x1xf32>
    %63 = arith.subf %61, %62 : vector<16x1xf32>
    %cst_19 = arith.constant 0.000000e+00 : f32
    %64 = vector.broadcast %cst_19 : f32 to vector<16x1xf32>
    %65 = arith.maximumf %63, %64 : vector<16x1xf32>
    %66 = vector.broadcast %56 : vector<16x1xf32> to vector<16x128xf32>
    %67 = arith.subf %52, %66 : vector<16x128xf32>
    %cst_20 = arith.constant 9.99999974E-6 : f32
    %68 = vector.broadcast %cst_20 : f32 to vector<16x1xf32>
    %69 = arith.addf %65, %68 : vector<16x1xf32>
    %70 = math.rsqrt %69 : vector<16x1xf32>
    %71 = vector.broadcast %70 : vector<16x1xf32> to vector<16x128xf32>
    %72 = arith.mulf %67, %71 : vector<16x128xf32>
    %73 = vector.broadcast %7 : vector<1x128xf32> to vector<16x128xf32>
    %74 = arith.mulf %72, %73 : vector<16x128xf32>
    %75 = vector.broadcast %8 : vector<1x128xf32> to vector<16x128xf32>
    %76 = arith.addf %74, %75 : vector<16x128xf32>
    %77 = arith.negf %76 : vector<16x128xf32>
    %78 = math.exp %77 : vector<16x128xf32>
    %cst_21 = arith.constant 1.000000e+00 : f32
    %79 = vector.broadcast %cst_21 : f32 to vector<16x128xf32>
    %80 = arith.addf %79, %78 : vector<16x128xf32>
    %81 = arith.divf %79, %80 : vector<16x128xf32>
    %82 = arith.mulf %76, %81 : vector<16x128xf32>
    %83 = tpu.concatenate %82, %1 in 1 : vector<16x128xf32>, vector<16x128xf32> -> vector<16x256xf32>
    %84 = arith.truncf %83 : vector<16x256xf32> to vector<16x256xbf16>
    %c0_22 = arith.constant 0 : index
    %c0_23 = arith.constant 0 : index
    %85 = vector.load %arg3[%c0_22, %c0_23] : memref<256x128xbf16, #tpu.memory_space<vmem>>, vector<256x128xbf16>
    %cst_24 = arith.constant dense<0.000000e+00> : vector<16x128xf32>
    %86 = tpu.matmul %84, %85, %cst_24 {dimension_numbers = #tpu.dot_dimension_numbers<[1], [0], [0], [1], [0, 0, 1, 1], [], []>} : vector<16x256xbf16>, vector<256x128xbf16>, vector<16x128xf32> -> vector<16x128xf32>
    %87 = vector.broadcast %10 : vector<1x128xf32> to vector<16x128xf32>
    %88 = arith.addf %86, %87 : vector<16x128xf32>
    %c0_25 = arith.constant 0 : index
    %c0_26 = arith.constant 0 : index
    %89 = vector.load %arg6[%c0_25, %c0_26] : memref<16x128xf32, #tpu.memory_space<vmem>>, vector<16x128xf32>
    tpu.vector_store %arg6[%c0_25, %c0_26], %88 {strides = array<i32>} : memref<16x128xf32, #tpu.memory_space<vmem>>, vector<16x128xf32>,
    return
  }
  func.func @transform_0(%arg0: i32) -> (i32, i32) {
    %c0_i32 = arith.constant 0 : i32
    %c0_i32_0 = arith.constant 0 : i32
    return %arg0, %c0_i32 : i32, i32
  }
  func.func @transform_1(%arg0: i32) -> (i32, i32) {
    %c0_i32 = arith.constant 0 : i32
    %c0_i32_0 = arith.constant 0 : i32
    %c0_i32_1 = arith.constant 0 : i32
    return %c0_i32, %c0_i32_0 : i32, i32
  }
  func.func @transform_2(%arg0: i32) -> (i32, i32) {
    %c0_i32 = arith.constant 0 : i32
    %c0_i32_0 = arith.constant 0 : i32
    %c0_i32_1 = arith.constant 0 : i32
    return %c0_i32, %c0_i32_0 : i32, i32
  }
  func.func @transform_3(%arg0: i32) -> (i32, i32) {
    %c0_i32 = arith.constant 0 : i32
    %c0_i32_0 = arith.constant 0 : i32
    %c0_i32_1 = arith.constant 0 : i32
    return %c0_i32, %c0_i32_0 : i32, i32
  }
  func.func @transform_4(%arg0: i32) -> (i32, i32) {
    %c0_i32 = arith.constant 0 : i32
    %c0_i32_0 = arith.constant 0 : i32
    %c0_i32_1 = arith.constant 0 : i32
    return %c0_i32, %c0_i32_0 : i32, i32
  }
  func.func @transform_5(%arg0: i32) -> (i32, i32) {
    %c0_i32 = arith.constant 0 : i32
    %c0_i32_0 = arith.constant 0 : i32
    return %arg0, %c0_i32 : i32, i32
  }
}

</mosaic_0001>

<llo_original>
// kernel: tpu_custom_call.1
$region0: #{tpu_custom_call.1}
  #allocation0 [shape = 'u32[]', space=smem, size = 0x4, offset = 0x4, fixed_abs, tag = 'smem constant byte address 0x4 - core index']
  #allocation1 [shape = 'u32[72,128]{1,0:T(1,128)}', space=vmem, size = 0x9000, scoped, tag = 'internal scratch']
  %s0 = inlined_call_operand.hbm [shape: f32[48,256], index: 0, kind: input, shape index: {}]
  %s1 = inlined_call_operand.hbm [shape: bf16[256,128], index: 1, kind: input, shape index: {}]
  %s2 = inlined_call_operand.hbm [shape: bf16[256,128], index: 2, kind: input, shape index: {}]
  %s3 = inlined_call_operand.vmem [shape: f32[2,128], index: 3, kind: input, shape index: {}]
  %s4 = inlined_call_operand.hbm [shape: f32[4,128], index: 4, kind: input, shape index: {}]
  %s5 = inlined_call_operand.hbm [shape: f32[48,128], index: 5, kind: output, shape index: {}]
  %s6 = sld [smem:[#allocation0]]
  $region69: #{tpu_custom_call.1} parent=0
    _
  %s8 = ssub.s32 1, %s6
  %s9 = scalar_select 0, %s8, %s6
  $region1: #{tpu_custom_call.1} parent=0
    #allocation2 [shape = 'u8[32768]{0}', space=vmem, size = 0x8000, scoped, tag = 'input window, operand 0']
    #allocation3 [shape = 's32[2]{0}', space=sflag, size = 0x8, scoped, tag = 'scoped memory for tpu_custom_call.1']
    #allocation4 [shape = 's32[2]{0}', space=sflag, size = 0x8, scoped, tag = 'scoped memory for tpu_custom_call.1']
    #allocation5 [shape = 'u8[65536]{0}', space=vmem, size = 0x10000, scoped, tag = 'input window, operand 1, single buffered']
    #allocation6 [shape = 's32[1]{0}', space=sflag, size = 0x4, scoped, tag = 'scoped memory for tpu_custom_call.1']
    #allocation7 [shape = 'u8[65536]{0}', space=vmem, size = 0x10000, scoped, tag = 'input window, operand 2, single buffered']
    #allocation8 [shape = 'u8[2048]{0}', space=vmem, size = 0x800, scoped, tag = 'input window, operand 4, single buffered']
    #allocation9 [shape = 's32[1]{0}', space=sflag, size = 0x4, scoped, tag = 'scoped memory for tpu_custom_call.1']
    #allocation10 [shape = 'u8[16384]{0}', space=vmem, size = 0x4000, scoped, tag = 'output window, operand 0']
    %10 = vsyncpa [#allocation3], 0
    %s11 = scalar_lea.sflag [#allocation3], 1
    %12 = vsyncpa %s11, 0
    %13 = vsyncpa [#allocation6], 0
    %14 = vsyncpa [#allocation9], 0
    %15 = vsyncpa [#allocation4], 0
    %s16 = scalar_lea.sflag [#allocation4], 1
    %17 = vsyncpa %s16, 0
    loop: start=0, step=1, limit=5
    $region2: #{tpu_custom_call.1} parent=1 // loop_pre_header
      _
    $region3: #{tpu_custom_call.1} parent=1 // loop_header
      %s19 = sphi 0, %s23
      %p20 = scmp.ge.s32.totalorder %s19, 5
      %s29 = sphi 0, %s31
      %s32 = sphi 0, %s29
      %s33 = sphi 0, %s32
      %s49 = sphi 0, %s33
      %s53 = sphi 0, %s53
      %s55 = sphi 0, %s53
      %s56 = sphi 0, %s55
      %s70 = sphi 0, %s56
      %s74 = sphi 0, %s74
      %s76 = sphi 0, %s74
      %s77 = sphi 0, %s76
      %s91 = sphi 0, %s77
      %s95 = sphi 0, %s95
      %s97 = sphi 0, %s95
      %s98 = sphi 0, %s97
      %s112 = sphi 0, %s98
      %s116 = sphi 0, %s116
      %s118 = sphi 0, %s116
      %s119 = sphi 0, %s118
      %s133 = sphi 0, %s119
      %s139 = sphi 0, %s141
      %s142 = sphi 0, %s139
      %s143 = sphi 0, %s142
      %s159 = sphi 0, %s143
    $region4: #{tpu_custom_call.1} parent=1 // loop_header_branch
      %22 = sbr.rel (%p20) target = $region8
    $region5: #{tpu_custom_call.1} parent=1 // loop_body
      %s24 = ssub.s32 %s19, 1
      %s25 = ssub.s32 %s19, 2
      %s26 = sadd.s32 %s19, 1
      %s27 = ssub.s32 %s19, %s26
      %p28 = scmp.eq.s32.totalorder %s27, 0
      %s30 = sadd.s32 %s29, 1
      %s31 = scalar_select %p28, %s29, %s30
      %p34 = pneg %p28
      %p35 = scmp.eq.s32.totalorder %s19, 2
      %p36 = por %p34, %p35
      %p37 = scmp.ne.s32.totalorder %s29, %s32
      %p38 = scmp.eq.s32.totalorder %s19, 0
      %p39 = por %p37, %p38
      %p40 = scmp.ne.s32.totalorder %s29, %s32
      %p41 = scmp.eq.s32.totalorder %s24, 2
      %p42 = por %p40, %p41
      %p43 = scmp.ne.s32.totalorder %s32, %s33
      %p44 = scmp.eq.s32.totalorder %s24, 0
      %p45 = por %p43, %p44
      %p46 = scmp.ne.s32.totalorder %s32, %s33
      %p47 = scmp.eq.s32.totalorder %s25, 2
      %p48 = por %p46, %p47
      %p50 = scmp.ne.s32.totalorder %s33, %s49
      %p51 = scmp.eq.s32.totalorder %s25, 0
      %p52 = por %p50, %p51
      %s54 = sadd.s32 %s53, 1
      %p57 = scmp.eq.s32.totalorder %s19, 2
      %p58 = scmp.ne.s32.totalorder %s53, %s55
      %p59 = scmp.eq.s32.totalorder %s19, 0
      %p60 = por %p58, %p59
      %p61 = scmp.ne.s32.totalorder %s53, %s55
      %p62 = scmp.eq.s32.totalorder %s24, 2
      %p63 = por %p61, %p62
      %p64 = scmp.ne.s32.totalorder %s55, %s56
      %p65 = scmp.eq.s32.totalorder %s24, 0
      %p66 = por %p64, %p65
      %p67 = scmp.ne.s32.totalorder %s55, %s56
      %p68 = scmp.eq.s32.totalorder %s25, 2
      %p69 = por %p67, %p68
      %p71 = scmp.ne.s32.totalorder %s56, %s70
      %p72 = scmp.eq.s32.totalorder %s25, 0
      %p73 = por %p71, %p72
      %s75 = sadd.s32 %s74, 1
      %p78 = scmp.eq.s32.totalorder %s19, 2
      %p79 = scmp.ne.s32.totalorder %s74, %s76
      %p80 = scmp.eq.s32.totalorder %s19, 0
      %p81 = por %p79, %p80
      %p82 = scmp.ne.s32.totalorder %s74, %s76
      %p83 = scmp.eq.s32.totalorder %s24, 2
      %p84 = por %p82, %p83
      %p85 = scmp.ne.s32.totalorder %s76, %s77
      %p86 = scmp.eq.s32.totalorder %s24, 0
      %p87 = por %p85, %p86
      %p88 = scmp.ne.s32.totalorder %s76, %s77
      %p89 = scmp.eq.s32.totalorder %s25, 2
      %p90 = por %p88, %p89
      %p92 = scmp.ne.s32.totalorder %s77, %s91
      %p93 = scmp.eq.s32.totalorder %s25, 0
      %p94 = por %p92, %p93
      %s96 = sadd.s32 %s95, 1
      %p99 = scmp.eq.s32.totalorder %s19, 2
      %p100 = scmp.ne.s32.totalorder %s95, %s97
      %p101 = scmp.eq.s32.totalorder %s19, 0
      %p102 = por %p100, %p101
      %p103 = scmp.ne.s32.totalorder %s95, %s97
      %p104 = scmp.eq.s32.totalorder %s24, 2
      %p105 = por %p103, %p104
      %p106 = scmp.ne.s32.totalorder %s97, %s98
      %p107 = scmp.eq.s32.totalorder %s24, 0
      %p108 = por %p106, %p107
      %p109 = scmp.ne.s32.totalorder %s97, %s98
      %p110 = scmp.eq.s32.totalorder %s25, 2
      %p111 = por %p109, %p110
      %p113 = scmp.ne.s32.totalorder %s98, %s112
      %p114 = scmp.eq.s32.totalorder %s25, 0
      %p115 = por %p113, %p114
      %s117 = sadd.s32 %s116, 1
      %p120 = scmp.eq.s32.totalorder %s19, 2
      %p121 = scmp.ne.s32.totalorder %s116, %s118
      %p122 = scmp.eq.s32.totalorder %s19, 0
      %p123 = por %p121, %p122
      %p124 = scmp.ne.s32.totalorder %s116, %s118
      %p125 = scmp.eq.s32.totalorder %s24, 2
      %p126 = por %p124, %p125
      %p127 = scmp.ne.s32.totalorder %s118, %s119
      %p128 = scmp.eq.s32.totalorder %s24, 0
      %p129 = por %p127, %p128
      %p130 = scmp.ne.s32.totalorder %s118, %s119
      %p131 = scmp.eq.s32.totalorder %s25, 2
      %p132 = por %p130, %p131
      %p134 = scmp.ne.s32.totalorder %s119, %s133
      %p135 = scmp.eq.s32.totalorder %s25, 0
      %p136 = por %p134, %p135
      %s137 = ssub.s32 %s19, %s26
      %p138 = scmp.eq.s32.totalorder %s137, 0
      %s140 = sadd.s32 %s139, 1
      %s141 = scalar_select %p138, %s139, %s140
      %p144 = pneg %p138
      %p145 = scmp.eq.s32.totalorder %s19, 2
      %p146 = por %p144, %p145
      %p147 = scmp.ne.s32.totalorder %s139, %s142
      %p148 = scmp.eq.s32.totalorder %s19, 0
      %p149 = por %p147, %p148
      %p150 = scmp.ne.s32.totalorder %s139, %s142
      %p151 = scmp.eq.s32.totalorder %s24, 2
      %p152 = por %p150, %p151
      %p153 = scmp.ne.s32.totalorder %s142, %s143
      %p154 = scmp.eq.s32.totalorder %s24, 0
      %p155 = por %p153, %p154
      %p156 = scmp.ne.s32.totalorder %s142, %s143
      %p157 = scmp.eq.s32.totalorder %s25, 2
      %p158 = por %p156, %p157
      %p160 = scmp.ne.s32.totalorder %s143, %s159
      %p161 = scmp.eq.s32.totalorder %s25, 0
      %p162 = por %p160, %p161
      %p163 = scmp.le.s32.totalorder 1, %s19
      %p164 = scmp.lt.s32.totalorder %s19, 4
      %p165 = pnand %p163, %p164
      %p166 = pneg %p165
      // Predicated region
      $region9: #{tpu_custom_call.1} parent=5 // pred_check
        _
      $region10: #{tpu_custom_call.1} parent=5 // pred_check_branch
        %168 = sbr.rel (%p165) target = $region12
      $region11: #{tpu_custom_call.1} parent=5 // pred_region
        %s169 = ssub.s32 %s19, 1
        // Predicated region
        $region13: #{tpu_custom_call.1} parent=11 // pred_check
          %p170 = pneg %p66
        $region14: #{tpu_custom_call.1} parent=11 // pred_check_branch
          %172 = sbr.rel (%p170) target = $region16
        $region15: #{tpu_custom_call.1} parent=11 // pred_region
          %174 = vsyncadd [#allocation6], 0
          %s175 = sshll.u32 %s1, 4
          %s176 = int_to_ptr.hbm [resolvable:$true] %s175
          %s177 = sshll.u32 [#allocation5], 4
          %s178 = int_to_ptr.vmem [resolvable:$true] %s177
          %183 = dma.hbm_to_vmem [thread:$0]  %s176, 2048, %s178, [#allocation6], 64, 64, 4
        $region16: #{tpu_custom_call.1} parent=11 // pred_fallthru
          _
        // Predicated region
        $region17: #{tpu_custom_call.1} parent=11 // pred_check
          %p184 = pneg %p87
        $region18: #{tpu_custom_call.1} parent=11 // pred_check_branch
          %186 = sbr.rel (%p184) target = $region20
        $region19: #{tpu_custom_call.1} parent=11 // pred_region
          %188 = vsyncadd [#allocation6], 0
          %s189 = sshll.u32 %s2, 4
          %s190 = int_to_ptr.hbm [resolvable:$true] %s189
          %s191 = sshll.u32 [#allocation7], 4
          %s192 = int_to_ptr.vmem [resolvable:$true] %s191
          %197 = dma.hbm_to_vmem [thread:$0]  %s190, 2048, %s192, [#allocation6], 64, 64, 4
        $region20: #{tpu_custom_call.1} parent=11 // pred_fallthru
          _
        // Predicated region
        $region21: #{tpu_custom_call.1} parent=11 // pred_check
          %p198 = pneg %p108
        $region22: #{tpu_custom_call.1} parent=11 // pred_check_branch
          %200 = sbr.rel (%p198) target = $region24
        $region23: #{tpu_custom_call.1} parent=11 // pred_region
          _
        $region24: #{tpu_custom_call.1} parent=11 // pred_fallthru
          _
        // Predicated region
        $region25: #{tpu_custom_call.1} parent=11 // pred_check
          %p201 = pneg %p129
        $region26: #{tpu_custom_call.1} parent=11 // pred_check_branch
          %203 = sbr.rel (%p201) target = $region28
        $region27: #{tpu_custom_call.1} parent=11 // pred_region
          %205 = vsyncadd [#allocation9], 0
          %s207 = sshll.u32 %s4, 4
          %s208 = int_to_ptr.hbm [resolvable:$true] %s207
          %s209 = sshll.u32 [#allocation8], 4
          %s210 = int_to_ptr.vmem [resolvable:$true] %s209
          %212 = dma.hbm_to_vmem [thread:$0]  %s208, 64, %s210, [#allocation9]
        $region28: #{tpu_custom_call.1} parent=11 // pred_fallthru
          _
      $region12: #{tpu_custom_call.1} parent=5 // pred_fallthru
        _
      %p213 = scmp.lt.s32.totalorder %s19, 3
      // Predicated region
      $region29: #{tpu_custom_call.1} parent=5 // pred_check
        %p214 = pneg %p213
      $region30: #{tpu_custom_call.1} parent=5 // pred_check_branch
        %216 = sbr.rel (%p214) target = $region32
      $region31: #{tpu_custom_call.1} parent=5 // pred_region
        // Predicated region
        $region33: #{tpu_custom_call.1} parent=31 // pred_check
          %p217 = pneg %p39
        $region34: #{tpu_custom_call.1} parent=31 // pred_check_branch
          %219 = sbr.rel (%p217) target = $region36
        $region35: #{tpu_custom_call.1} parent=31 // pred_region
          %s220 = sand.u32 %s29, 1
          %s221 = scalar_lea.sflag [#allocation3], %s220
          %s222 = sand.u32 %s29, 1
          %s223 = smul.addr %s222, 32
          %s224 = scalar_lea.vmem [#allocation2], %s223
          %s225 = smul.u32 2, %s19
          %227 = vsyncadd %s221, 0
          %s228 = smul.addr %s225, 2
          %s229 = smul.addr %s228, 8
          %s230 = scalar_lea.hbm %s0, %s229
          %s231 = sshll.u32 %s230, 4
          %s232 = int_to_ptr.hbm [resolvable:$true] %s231
          %s233 = sshll.u32 %s224, 4
          %s234 = int_to_ptr.vmem [resolvable:$true] %s233
          %239 = dma.hbm_to_vmem [thread:$0]  %s232, 512, %s234, %s221, 256, 256, 16
        $region36: #{tpu_custom_call.1} parent=31 // pred_fallthru
          _
      $region32: #{tpu_custom_call.1} parent=5 // pred_fallthru
        _
      %p240 = scmp.le.s32.totalorder 1, %s19
      %p241 = scmp.lt.s32.totalorder %s19, 4
      %p242 = pnand %p240, %p241
      %p243 = pneg %p242
      // Predicated region
      $region37: #{tpu_custom_call.1} parent=5 // pred_check
        _
      $region38: #{tpu_custom_call.1} parent=5 // pred_check_branch
        %245 = sbr.rel (%p242) target = $region40
      $region39: #{tpu_custom_call.1} parent=5 // pred_region
        %s246 = ssub.s32 %s19, 1
        %s247 = sand.u32 %s32, 1
        %s248 = scalar_lea.sflag [#allocation3], %s247
        %s249 = sand.u32 %s32, 1
        %s250 = smul.addr %s249, 32
        %s251 = scalar_lea.vmem [#allocation2], %s250
        // Predicated region
        $region41: #{tpu_custom_call.1} parent=39 // pred_check
          %p252 = pneg %p45
        $region42: #{tpu_custom_call.1} parent=39 // pred_check_branch
          %254 = sbr.rel (%p252) target = $region44
        $region43: #{tpu_custom_call.1} parent=39 // pred_region
          %256 = dma.done %s248, 512
        $region44: #{tpu_custom_call.1} parent=39 // pred_fallthru
          _
        // Predicated region
        $region45: #{tpu_custom_call.1} parent=39 // pred_check
          %p257 = pneg %p66
        $region46: #{tpu_custom_call.1} parent=39 // pred_check_branch
          %259 = sbr.rel (%p257) target = $region48
        $region47: #{tpu_custom_call.1} parent=39 // pred_region
          %261 = dma.done [#allocation6], 2048
        $region48: #{tpu_custom_call.1} parent=39 // pred_fallthru
          _
        // Predicated region
        $region49: #{tpu_custom_call.1} parent=39 // pred_check
          %p262 = pneg %p87
        $region50: #{tpu_custom_call.1} parent=39 // pred_check_branch
          %264 = sbr.rel (%p262) target = $region52
        $region51: #{tpu_custom_call.1} parent=39 // pred_region
          %266 = dma.done [#allocation6], 2048
        $region52: #{tpu_custom_call.1} parent=39 // pred_fallthru
          _
        // Predicated region
        $region53: #{tpu_custom_call.1} parent=39 // pred_check
          %p267 = pneg %p129
        $region54: #{tpu_custom_call.1} parent=39 // pred_check_branch
          %269 = sbr.rel (%p267) target = $region56
        $region55: #{tpu_custom_call.1} parent=39 // pred_region
          %271 = dma.done [#allocation9], 64
        $region56: #{tpu_custom_call.1} parent=39 // pred_fallthru
          _
        %s272 = sand.u32 %s32, 1
        %s273 = scalar_lea.sflag [#allocation3], %s272
        %s274 = sand.u32 %s32, 1
        %s275 = smul.addr %s274, 32
        %s276 = scalar_lea.vmem [#allocation2], %s275
        %p277 = pneg %p45
        %p278 = pneg %p42
        %p279 = pneg %p66
        %p280 = pneg %p63
        %p281 = pneg %p87
        %p282 = pneg %p84
        %p283 = pneg %p108
        %p284 = pneg %p105
        %p285 = pneg %p129
        %p286 = pneg %p126
        %p287 = pneg %p155
        %p288 = pneg %p152
        %s289 = sand.u32 %s142, 1
        %s290 = scalar_lea.sflag [#allocation4], %s289
        %s291 = sand.u32 %s142, 1
        %s292 = smul.addr %s291, 16
        %s293 = scalar_lea.vmem [#allocation10], %s292
        %s294 = smul.u32 2, %s24
        %s295 = smul.u32 2, %s24
        %v296 = vld [vmem:[%s251] sm:$0xff]
        %v297 = vld [vmem:[%s251 + $0x8] sm:$0xff]
        %v298 = vld [vmem:[%s251 + $0x10] sm:$0xff]
        %v299 = vld [vmem:[%s251 + $0x18] sm:$0xff]
        %v300 = vld [vmem:[%s3] sm:$0x3]
        %v301 = vld [vmem:[#allocation8] sm:$0xf]
        %302 = vadd.xlane.f32.xlu0 %v296
        %v303 = vpop.xlane.xlu0 %302
        %304 = vadd.xlane.f32.xlu0 %v298
        %v305 = vpop.xlane.xlu0 %304
        %v306 = vmul.f32 %v303, 0.03125
        %v307 = vmul.f32 %v305, 0.03125
        %v308 = vmul.f32 %v296, %v296
        %v309 = vmul.f32 %v298, %v298
        %310 = vadd.xlane.f32.xlu0 %v308
        %v311 = vpop.xlane.xlu0 %310
        %312 = vadd.xlane.f32.xlu0 %v309
        %v313 = vpop.xlane.xlu0 %312
        %v314 = vmul.f32 %v311, 0.03125
        %v315 = vmul.f32 %v313, 0.03125
        %v316 = vmul.f32 %v306, %v306
        %v317 = vmul.f32 %v307, %v307
        %v318 = vsub.f32 %v314, %v316
        %v319 = vsub.f32 %v315, %v317
        %v320 = vmax.f32 %v318, 0.0
        %v321 = vmax.f32 %v319, 0.0
        %v322 = vsub.f32 %v296, %v306
        %v323 = vsub.f32 %v298, %v307
        %v324 = vadd.f32 %v320, 1e-05
        %v325 = vadd.f32 %v321, 1e-05
        %v326 = vrsqrt.pop %v324
        %v327 = vmul.f32 %v326, %v324
        %v328 = vmul.f32 %v327, %v326
        %v329 = vmul.f32 0.5, %v328
        %v330 = vsub.f32 1.5, %v329
        %v331 = vmul.f32 %v326, %v330
        %vm332 = vweird.f32 %v324
        %vm333 = vweird.f32 %v326
        %vm334 = vmor %vm332, %vm333
        %v335 = vsel %vm334, %v326, %v331
        %v336 = vrsqrt.pop %v325
        %v337 = vmul.f32 %v336, %v325
        %v338 = vmul.f32 %v337, %v336
        %v339 = vmul.f32 0.5, %v338
        %v340 = vsub.f32 1.5, %v339
        %v341 = vmul.f32 %v336, %v340
        %vm342 = vweird.f32 %v325
        %vm343 = vweird.f32 %v336
        %vm344 = vmor %vm342, %vm343
        %v345 = vsel %vm344, %v336, %v341
        %v346 = vmul.f32 %v322, %v335
        %v347 = vmul.f32 %v323, %v345
        %v348 = vperm.slane %v300, 0
        %v349 = vmul.f32 %v346, %v348
        %v350 = vmul.f32 %v347, %v348
        %v351 = vperm.slane %v300, 1
        %v352 = vadd.f32 %v349, %v351
        %v353 = vadd.f32 %v350, %v351
        %v354 = vxor.u32 %v352, 2147483648
        %v355 = vxor.u32 %v353, 2147483648
        %v356 = vmul.f32 %v354, 1.442695
        %v357 = vpow.pop %v356
        %v358 = vmul.f32 %v355, 1.442695
        %v359 = vpow.pop %v358
        %v360 = vadd.f32 %v357, 1.0
        %v361 = vadd.f32 %v359, 1.0
        %v362 = vrcp.pop %v360
        %v363 = vmul.f32 %v360, %v362
        %v364 = vsub.f32 1.0, %v363
        %v365 = vmul.f32 %v362, %v364
        %v366 = vadd.f32 %v362, %v365
        %vm367 = vweird.f32 %v360
        %vm368 = vweird.f32 %v362
        %vm369 = vmor %vm367, %vm368
        %v370 = vsel %vm369, %v362, %v366
        %v371 = vand.u32 2147483647, %v360
        %vm372 = vcmp.eq.f32.partialorder %v371, 8.507059e+37
        %v373 = vand.u32 %v360, 2147483648
        %v374 = vor.u32 1.1754944e-38, %v373
        %v375 = vsel %vm372, %v374, %v370
        %v376 = vmul.f32 1.0, %v375
        %v377 = vrcp.pop %v361
        %v378 = vmul.f32 %v361, %v377
        %v379 = vsub.f32 1.0, %v378
        %v380 = vmul.f32 %v377, %v379
        %v381 = vadd.f32 %v377, %v380
        %vm382 = vweird.f32 %v361
        %vm383 = vweird.f32 %v377
        %vm384 = vmor %vm382, %vm383
        %v385 = vsel %vm384, %v377, %v381
        %v386 = vand.u32 2147483647, %v361
        %vm387 = vcmp.eq.f32.partialorder %v386, 8.507059e+37
        %v388 = vand.u32 %v361, 2147483648
        %v389 = vor.u32 1.1754944e-38, %v388
        %v390 = vsel %vm387, %v389, %v385
        %v391 = vmul.f32 1.0, %v390
        %v392 = vmul.f32 %v352, %v376
        %v393 = vmul.f32 %v353, %v391
        %v394 = vxor.u32 %v297, 2147483648
        %v395 = vxor.u32 %v299, 2147483648
        %v396 = vmul.f32 %v394, 1.442695
        %v397 = vpow.pop %v396
        %v398 = vmul.f32 %v395, 1.442695
        %v399 = vpow.pop %v398
        %v400 = vadd.f32 %v397, 1.0
        %v401 = vadd.f32 %v399, 1.0
        %v402 = vrcp.pop %v400
        %v403 = vmul.f32 %v400, %v402
        %v404 = vsub.f32 1.0, %v403
        %v405 = vmul.f32 %v402, %v404
        %v406 = vadd.f32 %v402, %v405
        %vm407 = vweird.f32 %v400
        %vm408 = vweird.f32 %v402
        %vm409 = vmor %vm407, %vm408
        %v410 = vsel %vm409, %v402, %v406
        %v411 = vand.u32 2147483647, %v400
        %vm412 = vcmp.eq.f32.partialorder %v411, 8.507059e+37
        %v413 = vand.u32 %v400, 2147483648
        %v414 = vor.u32 1.1754944e-38, %v413
        %v415 = vsel %vm412, %v414, %v410
        %v416 = vmul.f32 1.0, %v415
        %v417 = vrcp.pop %v401
        %v418 = vmul.f32 %v401, %v417
        %v419 = vsub.f32 1.0, %v418
        %v420 = vmul.f32 %v417, %v419
        %v421 = vadd.f32 %v417, %v420
        %vm422 = vweird.f32 %v401
        %vm423 = vweird.f32 %v417
        %vm424 = vmor %vm422, %vm423
        %v425 = vsel %vm424, %v417, %v421
        %v426 = vand.u32 2147483647, %v401
        %vm427 = vcmp.eq.f32.partialorder %v426, 8.507059e+37
        %v428 = vand.u32 %v401, 2147483648
        %v429 = vor.u32 1.1754944e-38, %v428
        %v430 = vsel %vm427, %v429, %v425
        %v431 = vmul.f32 1.0, %v430
        %v432 = vmul.f32 %v297, %v416
        %v433 = vmul.f32 %v299, %v431
        %v434 = vpack.c.bf16 %v393, %v392
        %v435 = vpack.c.bf16 %v433, %v432
        %v436 = vld [vmem:[#allocation5] sm:$0xf]
        %v437 = vld [vmem:[#allocation5 + $0x4] sm:$0xf]
        %v438 = vld [vmem:[#allocation5 + $0x8] sm:$0xf]
        %v439 = vld [vmem:[#allocation5 + $0xc] sm:$0xf]
        %v440 = vld [vmem:[#allocation5 + $0x10] sm:$0xf]
        %v441 = vld [vmem:[#allocation5 + $0x14] sm:$0xf]
        %v442 = vld [vmem:[#allocation5 + $0x18] sm:$0xf]
        %v443 = vld [vmem:[#allocation5 + $0x1c] sm:$0xf]
        %v444 = vld [vmem:[#allocation5 + $0x20] sm:$0xf]
        %v445 = vld [vmem:[#allocation5 + $0x24] sm:$0xf]
        %v446 = vld [vmem:[#allocation5 + $0x28] sm:$0xf]
        %v447 = vld [vmem:[#allocation5 + $0x2c] sm:$0xf]
        %v448 = vld [vmem:[#allocation5 + $0x30] sm:$0xf]
        %v449 = vld [vmem:[#allocation5 + $0x34] sm:$0xf]
        %v450 = vld [vmem:[#allocation5 + $0x38] sm:$0xf]
        %v451 = vld [vmem:[#allocation5 + $0x3c] sm:$0xf]
        %v452 = vld [vmem:[#allocation5 + $0x40] sm:$0xf]
        %v453 = vld [vmem:[#allocation5 + $0x44] sm:$0xf]
        %v454 = vld [vmem:[#allocation5 + $0x48] sm:$0xf]
        %v455 = vld [vmem:[#allocation5 + $0x4c] sm:$0xf]
        %v456 = vld [vmem:[#allocation5 + $0x50] sm:$0xf]
        %v457 = vld [vmem:[#allocation5 + $0x54] sm:$0xf]
        %v458 = vld [vmem:[#allocation5 + $0x58] sm:$0xf]
        %v459 = vld [vmem:[#allocation5 + $0x5c] sm:$0xf]
        %v460 = vld [vmem:[#allocation5 + $0x60] sm:$0xf]
        %v461 = vld [vmem:[#allocation5 + $0x64] sm:$0xf]
        %v462 = vld [vmem:[#allocation5 + $0x68] sm:$0xf]
        %v463 = vld [vmem:[#allocation5 + $0x6c] sm:$0xf]
        %v464 = vld [vmem:[#allocation5 + $0x70] sm:$0xf]
        %v465 = vld [vmem:[#allocation5 + $0x74] sm:$0xf]
        %v466 = vld [vmem:[#allocation5 + $0x78] sm:$0xf]
        %v467 = vld [vmem:[#allocation5 + $0x7c] sm:$0xf]
        %v468 = vperm.slane %v301, 2
        %v501 = vunpack.c.l.b16 %v436
        %v502 = vunpack.c.l.b16 %v437
        %v503 = vunpack.c.l.b16 %v438
        %v504 = vunpack.c.l.b16 %v439
        %v505 = vunpack.c.l.b16 %v440
        %v506 = vunpack.c.l.b16 %v441
        %v507 = vunpack.c.l.b16 %v442
        %v508 = vunpack.c.l.b16 %v443
        %v509 = vunpack.c.l.b16 %v444
        %v510 = vunpack.c.l.b16 %v445
        %v511 = vunpack.c.l.b16 %v446
        %v512 = vunpack.c.l.b16 %v447
        %v513 = vunpack.c.l.b16 %v448
        %v514 = vunpack.c.l.b16 %v449
        %v515 = vunpack.c.l.b16 %v450
        %v516 = vunpack.c.l.b16 %v451
        %v517 = vunpack.c.l.b16 %v452
        %v518 = vunpack.c.l.b16 %v453
        %v519 = vunpack.c.l.b16 %v454
        %v520 = vunpack.c.l.b16 %v455
        %v521 = vunpack.c.l.b16 %v456
        %v522 = vunpack.c.l.b16 %v457
        %v523 = vunpack.c.l.b16 %v458
        %v524 = vunpack.c.l.b16 %v459
        %v525 = vunpack.c.l.b16 %v460
        %v526 = vunpack.c.l.b16 %v461
        %v527 = vunpack.c.l.b16 %v462
        %v528 = vunpack.c.l.b16 %v463
        %v529 = vunpack.c.l.b16 %v464
        %v530 = vunpack.c.l.b16 %v465
        %v531 = vunpack.c.l.b16 %v466
        %v532 = vunpack.c.l.b16 %v467
        %v533 = vpack.c.b16 %v502, %v501
        %v534 = vpack.c.b16 %v504, %v503
        %v535 = vpack.c.b16 %v506, %v505
        %v536 = vpack.c.b16 %v508, %v507
        %v537 = vpack.c.b16 %v510, %v509
        %v538 = vpack.c.b16 %v512, %v511
        %v539 = vpack.c.b16 %v514, %v513
        %v540 = vpack.c.b16 %v516, %v515
        %v541 = vpack.c.b16 %v518, %v517
        %v542 = vpack.c.b16 %v520, %v519
        %v543 = vpack.c.b16 %v522, %v521
        %v544 = vpack.c.b16 %v524, %v523
        %v545 = vpack.c.b16 %v526, %v525
        %v546 = vpack.c.b16 %v528, %v527
        %v547 = vpack.c.b16 %v530, %v529
        %v548 = vpack.c.b16 %v532, %v531
        %565 = vmatpush.bf16.msra.mxu0 %v540
        %566 = vmatpush.bf16.msra.mxu0 %v539
        %567 = vmatpush.bf16.msra.mxu0 %v538
        %568 = vmatpush.bf16.msra.mxu0 %v537
        %569 = vmatpush.bf16.msra.mxu0 %v536
        %570 = vmatpush.bf16.msra.mxu0 %v535
        %571 = vmatpush.bf16.msra.mxu0 %v534
        %572 = vmatpush.bf16.msra.mxu0 %v533
        %573 = vmatmul.bf16.gmra.mxu0 %v434
        %v574 = vpop.f32.mrf.mxu0
        %v575 = vadd.f32 %v468, %v574
        %v576 = vpop.f32.mrf.mxu0
        %v577 = vadd.f32 %v468, %v576
        %578 = vdwg.mxu0
        %579 = vmatpush.bf16.msra.mxu0 %v548
        %580 = vmatpush.bf16.msra.mxu0 %v547
        %581 = vmatpush.bf16.msra.mxu0 %v546
        %582 = vmatpush.bf16.msra.mxu0 %v545
        %583 = vmatpush.bf16.msra.mxu0 %v544
        %584 = vmatpush.bf16.msra.mxu0 %v543
        %585 = vmatpush.bf16.msra.mxu0 %v542
        %586 = vmatpush.bf16.msra.mxu0 %v541
        %587 = vmatmul.bf16.gmra.mxu0 %v435
        %v588 = vpop.f32.mrf.mxu0
        %v589 = vadd.f32 %v575, %v588
        %v590 = vpop.f32.mrf.mxu0
        %v591 = vadd.f32 %v577, %v590
        %592 = vdwg.mxu0
        %593 = vadd.xlane.f32.xlu0 %v589
        %v594 = vpop.xlane.xlu0 %593
        %595 = vadd.xlane.f32.xlu0 %v591
        %v596 = vpop.xlane.xlu0 %595
        %v597 = vmul.f32 %v594, 0.015625
        %v598 = vmul.f32 %v596, 0.015625
        %v599 = vmul.f32 %v589, %v589
        %v600 = vmul.f32 %v591, %v591
        %601 = vadd.xlane.f32.xlu0 %v599
        %v602 = vpop.xlane.xlu0 %601
        %603 = vadd.xlane.f32.xlu0 %v600
        %v604 = vpop.xlane.xlu0 %603
        %v605 = vmul.f32 %v602, 0.015625
        %v606 = vmul.f32 %v604, 0.015625
        %v607 = vmul.f32 %v597, %v597
        %v608 = vmul.f32 %v598, %v598
        %v609 = vsub.f32 %v605, %v607
        %v610 = vsub.f32 %v606, %v608
        %v611 = vmax.f32 %v609, 0.0
        %v612 = vmax.f32 %v610, 0.0
        %v613 = vsub.f32 %v589, %v597
        %v614 = vsub.f32 %v591, %v598
        %v615 = vadd.f32 %v611, 1e-05
        %v616 = vadd.f32 %v612, 1e-05
        %v617 = vrsqrt.pop %v615
        %v618 = vmul.f32 %v617, %v615
        %v619 = vmul.f32 %v618, %v617
        %v620 = vmul.f32 0.5, %v619
        %v621 = vsub.f32 1.5, %v620
        %v622 = vmul.f32 %v617, %v621
        %vm623 = vweird.f32 %v615
        %vm624 = vweird.f32 %v617
        %vm625 = vmor %vm623, %vm624
        %v626 = vsel %vm625, %v617, %v622
        %v627 = vrsqrt.pop %v616
        %v628 = vmul.f32 %v627, %v616
        %v629 = vmul.f32 %v628, %v627
        %v630 = vmul.f32 0.5, %v629
        %v631 = vsub.f32 1.5, %v630
        %v632 = vmul.f32 %v627, %v631
        %vm633 = vweird.f32 %v616
        %vm634 = vweird.f32 %v627
        %vm635 = vmor %vm633, %vm634
        %v636 = vsel %vm635, %v627, %v632
        %v637 = vmul.f32 %v613, %v626
        %v638 = vmul.f32 %v614, %v636
        %v639 = vperm.slane %v301, 0
        %v640 = vmul.f32 %v637, %v639
        %v641 = vmul.f32 %v638, %v639
        %v642 = vperm.slane %v301, 1
        %v643 = vadd.f32 %v640, %v642
        %v644 = vadd.f32 %v641, %v642
        %v645 = vxor.u32 %v643, 2147483648
        %v646 = vxor.u32 %v644, 2147483648
        %v647 = vmul.f32 %v645, 1.442695
        %v648 = vpow.pop %v647
        %v649 = vmul.f32 %v646, 1.442695
        %v650 = vpow.pop %v649
        %v651 = vadd.f32 %v648, 1.0
        %v652 = vadd.f32 %v650, 1.0
        %v653 = vrcp.pop %v651
        %v654 = vmul.f32 %v651, %v653
        %v655 = vsub.f32 1.0, %v654
        %v656 = vmul.f32 %v653, %v655
        %v657 = vadd.f32 %v653, %v656
        %vm658 = vweird.f32 %v651
        %vm659 = vweird.f32 %v653
        %vm660 = vmor %vm658, %vm659
        %v661 = vsel %vm660, %v653, %v657
        %v662 = vand.u32 2147483647, %v651
        %vm663 = vcmp.eq.f32.partialorder %v662, 8.507059e+37
        %v664 = vand.u32 %v651, 2147483648
        %v665 = vor.u32 1.1754944e-38, %v664
        %v666 = vsel %vm663, %v665, %v661
        %v667 = vmul.f32 1.0, %v666
        %v668 = vrcp.pop %v652
        %v669 = vmul.f32 %v652, %v668
        %v670 = vsub.f32 1.0, %v669
        %v671 = vmul.f32 %v668, %v670
        %v672 = vadd.f32 %v668, %v671
        %vm673 = vweird.f32 %v652
        %vm674 = vweird.f32 %v668
        %vm675 = vmor %vm673, %vm674
        %v676 = vsel %vm675, %v668, %v672
        %v677 = vand.u32 2147483647, %v652
        %vm678 = vcmp.eq.f32.partialorder %v677, 8.507059e+37
        %v679 = vand.u32 %v652, 2147483648
        %v680 = vor.u32 1.1754944e-38, %v679
        %v681 = vsel %vm678, %v680, %v676
        %v682 = vmul.f32 1.0, %v681
        %v683 = vmul.f32 %v643, %v667
        %v684 = vmul.f32 %v644, %v682
        %v685 = vpack.c.bf16 %v684, %v683
        %v686 = vpack.c.bf16 %v298, %v296
        %v687 = vld [vmem:[#allocation7] sm:$0xf]
        %v688 = vld [vmem:[#allocation7 + $0x4] sm:$0xf]
        %v689 = vld [vmem:[#allocation7 + $0x8] sm:$0xf]
        %v690 = vld [vmem:[#allocation7 + $0xc] sm:$0xf]
        %v691 = vld [vmem:[#allocation7 + $0x10] sm:$0xf]
        %v692 = vld [vmem:[#allocation7 + $0x14] sm:$0xf]
        %v693 = vld [vmem:[#allocation7 + $0x18] sm:$0xf]
        %v694 = vld [vmem:[#allocation7 + $0x1c] sm:$0xf]
        %v695 = vld [vmem:[#allocation7 + $0x20] sm:$0xf]
        %v696 = vld [vmem:[#allocation7 + $0x24] sm:$0xf]
        %v697 = vld [vmem:[#allocation7 + $0x28] sm:$0xf]
        %v698 = vld [vmem:[#allocation7 + $0x2c] sm:$0xf]
        %v699 = vld [vmem:[#allocation7 + $0x30] sm:$0xf]
        %v700 = vld [vmem:[#allocation7 + $0x34] sm:$0xf]
        %v701 = vld [vmem:[#allocation7 + $0x38] sm:$0xf]
        %v702 = vld [vmem:[#allocation7 + $0x3c] sm:$0xf]
        %v703 = vld [vmem:[#allocation7 + $0x40] sm:$0xf]
        %v704 = vld [vmem:[#allocation7 + $0x44] sm:$0xf]
        %v705 = vld [vmem:[#allocation7 + $0x48] sm:$0xf]
        %v706 = vld [vmem:[#allocation7 + $0x4c] sm:$0xf]
        %v707 = vld [vmem:[#allocation7 + $0x50] sm:$0xf]
        %v708 = vld [vmem:[#allocation7 + $0x54] sm:$0xf]
        %v709 = vld [vmem:[#allocation7 + $0x58] sm:$0xf]
        %v710 = vld [vmem:[#allocation7 + $0x5c] sm:$0xf]
        %v711 = vld [vmem:[#allocation7 + $0x60] sm:$0xf]
        %v712 = vld [vmem:[#allocation7 + $0x64] sm:$0xf]
        %v713 = vld [vmem:[#allocation7 + $0x68] sm:$0xf]
        %v714 = vld [vmem:[#allocation7 + $0x6c] sm:$0xf]
        %v715 = vld [vmem:[#allocation7 + $0x70] sm:$0xf]
        %v716 = vld [vmem:[#allocation7 + $0x74] sm:$0xf]
        %v717 = vld [vmem:[#allocation7 + $0x78] sm:$0xf]
        %v718 = vld [vmem:[#allocation7 + $0x7c] sm:$0xf]
        %v719 = vperm.slane %v301, 3
        %v752 = vunpack.c.l.b16 %v687
        %v753 = vunpack.c.l.b16 %v688
        %v754 = vunpack.c.l.b16 %v689
        %v755 = vunpack.c.l.b16 %v690
        %v756 = vunpack.c.l.b16 %v691
        %v757 = vunpack.c.l.b16 %v692
        %v758 = vunpack.c.l.b16 %v693
        %v759 = vunpack.c.l.b16 %v694
        %v760 = vunpack.c.l.b16 %v695
        %v761 = vunpack.c.l.b16 %v696
        %v762 = vunpack.c.l.b16 %v697
        %v763 = vunpack.c.l.b16 %v698
        %v764 = vunpack.c.l.b16 %v699
        %v765 = vunpack.c.l.b16 %v700
        %v766 = vunpack.c.l.b16 %v701
        %v767 = vunpack.c.l.b16 %v702
        %v768 = vunpack.c.l.b16 %v703
        %v769 = vunpack.c.l.b16 %v704
        %v770 = vunpack.c.l.b16 %v705
        %v771 = vunpack.c.l.b16 %v706
        %v772 = vunpack.c.l.b16 %v707
        %v773 = vunpack.c.l.b16 %v708
        %v774 = vunpack.c.l.b16 %v709
        %v775 = vunpack.c.l.b16 %v710
        %v776 = vunpack.c.l.b16 %v711
        %v777 = vunpack.c.l.b16 %v712
        %v778 = vunpack.c.l.b16 %v713
        %v779 = vunpack.c.l.b16 %v714
        %v780 = vunpack.c.l.b16 %v715
        %v781 = vunpack.c.l.b16 %v716
        %v782 = vunpack.c.l.b16 %v717
        %v783 = vunpack.c.l.b16 %v718
        %v784 = vpack.c.b16 %v753, %v752
        %v785 = vpack.c.b16 %v755, %v754
        %v786 = vpack.c.b16 %v757, %v756
        %v787 = vpack.c.b16 %v759, %v758
        %v788 = vpack.c.b16 %v761, %v760
        %v789 = vpack.c.b16 %v763, %v762
        %v790 = vpack.c.b16 %v765, %v764
        %v791 = vpack.c.b16 %v767, %v766
        %v792 = vpack.c.b16 %v769, %v768
        %v793 = vpack.c.b16 %v771, %v770
        %v794 = vpack.c.b16 %v773, %v772
        %v795 = vpack.c.b16 %v775, %v774
        %v796 = vpack.c.b16 %v777, %v776
        %v797 = vpack.c.b16 %v779, %v778
        %v798 = vpack.c.b16 %v781, %v780
        %v799 = vpack.c.b16 %v783, %v782
        %816 = vmatpush.bf16.msra.mxu0 %v791
        %817 = vmatpush.bf16.msra.mxu0 %v790
        %818 = vmatpush.bf16.msra.mxu0 %v789
        %819 = vmatpush.bf16.msra.mxu0 %v788
        %820 = vmatpush.bf16.msra.mxu0 %v787
        %821 = vmatpush.bf16.msra.mxu0 %v786
        %822 = vmatpush.bf16.msra.mxu0 %v785
        %823 = vmatpush.bf16.msra.mxu0 %v784
        %824 = vmatmul.bf16.gmra.mxu0 %v685
        %v825 = vpop.f32.mrf.mxu0
        %v826 = vadd.f32 %v719, %v825
        %v827 = vpop.f32.mrf.mxu0
        %v828 = vadd.f32 %v719, %v827
        %829 = vdwg.mxu0
        %830 = vmatpush.bf16.msra.mxu0 %v799
        %831 = vmatpush.bf16.msra.mxu0 %v798
        %832 = vmatpush.bf16.msra.mxu0 %v797
        %833 = vmatpush.bf16.msra.mxu0 %v796
        %834 = vmatpush.bf16.msra.mxu0 %v795
        %835 = vmatpush.bf16.msra.mxu0 %v794
        %836 = vmatpush.bf16.msra.mxu0 %v793
        %837 = vmatpush.bf16.msra.mxu0 %v792
        %838 = vmatmul.bf16.gmra.mxu0 %v686
        %v839 = vpop.f32.mrf.mxu0
        %v840 = vadd.f32 %v826, %v839
        %v841 = vpop.f32.mrf.mxu0
        %v842 = vadd.f32 %v828, %v841
        %843 = vdwg.mxu0
        %844 = vst [vmem:[%s293] sm:$0xff] %v840
        %845 = vst [vmem:[%s293 + $0x8] sm:$0xff] %v842
        %s846 = sand.u32 %s142, 1
        %s847 = scalar_lea.sflag [#allocation4], %s846
        %s848 = sand.u32 %s142, 1
        %s849 = smul.addr %s848, 16
        %s850 = scalar_lea.vmem [#allocation10], %s849
        // Predicated region
        $region57: #{tpu_custom_call.1} parent=39 // pred_check
          %p851 = pneg %p152
        $region58: #{tpu_custom_call.1} parent=39 // pred_check_branch
          %853 = sbr.rel (%p851) target = $region60
        $region59: #{tpu_custom_call.1} parent=39 // pred_region
          %s854 = smul.u32 2, %s24
          %856 = vsyncadd %s847, 0
          %s857 = smul.addr %s854, 8
          %s858 = scalar_lea.hbm %s5, %s857
          %s859 = sshll.u32 %s850, 4
          %s860 = int_to_ptr.vmem [resolvable:$true] %s859
          %s861 = sshll.u32 %s858, 4
          %s862 = int_to_ptr.hbm [resolvable:$true] %s861
          %867 = dma.vmem_to_hbm [thread:$0]  %s860, 256, %s862, %s847, 128, 128, 8
        $region60: #{tpu_custom_call.1} parent=39 // pred_fallthru
          _
      $region40: #{tpu_custom_call.1} parent=5 // pred_fallthru
        _
      %p868 = scmp.le.s32.totalorder 2, %s19
      // Predicated region
      $region61: #{tpu_custom_call.1} parent=5 // pred_check
        %p869 = pneg %p868
      $region62: #{tpu_custom_call.1} parent=5 // pred_check_branch
        %871 = sbr.rel (%p869) target = $region64
      $region63: #{tpu_custom_call.1} parent=5 // pred_region
        %s872 = ssub.s32 %s19, 2
        // Predicated region
        $region65: #{tpu_custom_call.1} parent=63 // pred_check
          %p873 = pneg %p158
        $region66: #{tpu_custom_call.1} parent=63 // pred_check_branch
          %875 = sbr.rel (%p873) target = $region68
        $region67: #{tpu_custom_call.1} parent=63 // pred_region
          %s876 = sand.u32 %s143, 1
          %s877 = scalar_lea.sflag [#allocation4], %s876
          %s878 = sand.u32 %s143, 1
          %s879 = smul.addr %s878, 16
          %s880 = scalar_lea.vmem [#allocation10], %s879
          %882 = dma.done %s877, 256
        $region68: #{tpu_custom_call.1} parent=63 // pred_fallthru
          _
      $region64: #{tpu_custom_call.1} parent=5 // pred_fallthru
        _
    $region6: #{tpu_custom_call.1} parent=1 // loop_footer
      %s23 = sadd.s32 1, %s19
    $region7: #{tpu_custom_call.1} parent=1 // loop_footer_branch
      %18 = sbr.rel target = $region3
    $region8: #{tpu_custom_call.1} parent=1 // loop_exit
      _
    %883 = vsyncpa [#allocation3], 1
    %s884 = scalar_lea.sflag [#allocation3], 1
    %885 = vsyncpa %s884, 1
    %886 = vsyncpa [#allocation6], 1
    %887 = vsyncpa [#allocation9], 1
    %888 = vsyncpa [#allocation4], 1
    %s889 = scalar_lea.sflag [#allocation4], 1
    %890 = vsyncpa %s889, 1

</llo_original>
